<compile_context>
chip_gen: v5e
topology: v5e:2x2
jax: 0.10.0
libtpu: 0.0.40
codegen_flags: <defaults>
</compile_context>

<pallas_src>
import math
import functools

import jax
import jax.numpy as jnp
from jax import lax
from jax.experimental import pallas as pl
from jax.experimental.pallas import tpu as pltpu


def _round_up(n: int, m: int) -> int:
    return ((n + m - 1) // m) * m


_MH_LANES = 128  # multi-hot selector width: n_tab=76 padded to a lane-aligned 128


# ---------------------------------------------------------------------------
# Sinusoid tables (PositionalEmbedding / FixedEmbedding), built in plain JAX.
# ---------------------------------------------------------------------------
def _sinusoid_table(n_pos: int, d_model: int) -> jnp.ndarray:
    """Matches PyTorch PositionalEmbedding / FixedEmbedding table (even d_model)."""
    position = jnp.arange(n_pos, dtype=jnp.float32)[:, None]                  # (n_pos, 1)
    div_term = jnp.exp(jnp.arange(0, d_model, 2, dtype=jnp.float32)
                       * -(math.log(10000.0) / d_model))                      # (d_model//2,)
    ang = position * div_term                                                 # (n_pos, d_model//2)
    tbl = jnp.zeros((n_pos, d_model), dtype=jnp.float32)
    tbl = tbl.at[:, 0::2].set(jnp.sin(ang))
    tbl = tbl.at[:, 1::2].set(jnp.cos(ang))
    return tbl


# ---------------------------------------------------------------------------
# Pallas kernels.
# ---------------------------------------------------------------------------
def _kernel_with_mark(xc_ref, xm_ref, wtab_ref, pe_ref, o_ref, *, n_fields):
    # xc_ref : (tl, 3C)        bf16  circular-conv taps [x_{t-1} | x_t | x_{t+1}]
    # xm_ref : (tl, 4)         int32 temporal marks, field offsets pre-added in wrapper
    # wtab   : (128+3C, D)     bf16  rows [0,76)=temporal tables, [76,128)=0, [128,..)=conv W
    # pe_ref : (tl, D)         f32   positional table slice (reused across batch axis)
    tl = xm_ref.shape[0]
    xm = xm_ref[...]
    lane = lax.broadcasted_iota(jnp.int32, (tl, _MH_LANES), 1)                # (tl, 128)
    hit = lane == xm[:, 0:1]
    for f in range(1, n_fields):
        hit = jnp.logical_or(hit, lane == xm[:, f:f + 1])
    mh = hit.astype(jnp.bfloat16)                                             # (tl, 128)
    # Single fused MXU pass: multi-hot lanes select temporal rows, conv-tap
    # lanes multiply the conv weights.  Concat boundary is 128-lane aligned.
    lhs = jnp.concatenate([mh, xc_ref[...]], axis=-1)                         # (tl, 128+3C) bf16
    acc = jnp.dot(lhs, wtab_ref[...], preferred_element_type=jnp.float32)
    # f32 epilogue add (keep f32 arithmetic: no bf16 VALU on v5e).
    o_ref[...] = (acc + pe_ref[...]).astype(o_ref.dtype)


def _kernel_no_mark(xc_ref, w_ref, pe_ref, o_ref):
    acc = jnp.dot(xc_ref[...], w_ref[...], preferred_element_type=jnp.float32)
    o_ref[...] = (acc + pe_ref[...]).astype(o_ref.dtype)


# ---------------------------------------------------------------------------
# DataEmbedding module (embed_type='fixed', freq='h') — params + pallas glue.
# ---------------------------------------------------------------------------
class DataEmbeddingPallas:
    def __init__(self, c_in, d_model, key, max_len=5000, tile_l=512,
                 out_dtype=jnp.bfloat16):
        assert d_model % 2 == 0, "even d_model assumed (matches sinusoid table)"
        self.c_in = c_in
        self.d_model = d_model
        self.tile_l = tile_l
        self.out_dtype = out_dtype
        self.max_len = max_len

        # TokenEmbedding conv weight: torch shape (d_model, c_in, 3),
        # kaiming_normal_(fan_in=c_in*3, gain=sqrt(2)).
        fan_in = c_in * 3
        std = math.sqrt(2.0) / math.sqrt(fan_in)
        w = jax.random.normal(key, (d_model, c_in, 3), dtype=jnp.float32) * std
        # f32 master in tap layout (3, C, D); fused (3C, D) for the kernels.
        self.conv_w_taps = jnp.transpose(w, (2, 1, 0))                        # (3, C, D)
        w_fused_f32 = self.conv_w_taps.reshape(3 * c_in, d_model)             # (3C, D)
        self.w_fused = w_fused_f32.astype(jnp.bfloat16)                       # x_mark=None path

        # Positional table: f32 (fetched once per L-tile, amortized over batch).
        self.pe = _sinusoid_table(max_len, d_model)                           # (max_len, D)

        # Fixed temporal tables (freq='h' -> month/day/weekday/hour).
        self.month_tbl = _sinusoid_table(13, d_model)
        self.day_tbl = _sinusoid_table(32, d_model)
        self.weekday_tbl = _sinusoid_table(7, d_model)
        self.hour_tbl = _sinusoid_table(24, d_model)
        sizes = (13, 32, 7, 24)          # x_mark columns: [month, day, weekday, hour]
        self.n_tab = int(sum(sizes))     # 76
        assert self.n_tab <= _MH_LANES
        self.offsets = jnp.array([sum(sizes[:i]) for i in range(len(sizes))],
                                 dtype=jnp.int32)                             # (4,)
        temporal = jnp.concatenate(
            [self.month_tbl, self.day_tbl, self.weekday_tbl, self.hour_tbl], axis=0)
        # Fused RHS: rows [0,76) temporal, [76,128) zeros, [128,128+3C) conv taps.
        wtab = jnp.zeros((_MH_LANES + 3 * c_in, d_model), jnp.float32)
        wtab = wtab.at[:self.n_tab].set(temporal)
        wtab = wtab.at[_MH_LANES:].set(w_fused_f32)
        self.wtab = wtab.astype(jnp.bfloat16)                                 # (128+3C, D)

    def _pick_tile(self, L):
        """Largest multiple of 8 that divides round_up(L,8) and is <= tile_l."""
        Lp = _round_up(L, 8)
        start = max(8, (min(self.tile_l, Lp) // 8) * 8)
        tl = 8
        for cand in range(start, 7, -8):
            if Lp % cand == 0:
                tl = cand
                break
        return tl, Lp

    def __call__(self, x, x_mark):
        # x: (B, L, c_in) float; x_mark: (B, L, >=4) int [month, day, weekday, hour] or None
        B, L, C = x.shape
        D = self.d_model
        has_mark = x_mark is not None

        tl, Lp = self._pick_tile(L)
        assert Lp <= self.max_len, "sequence length exceeds positional table"
        pad = Lp != L

        # Circular-conv halo handled in the wrapper (C is tiny -> negligible
        # extra HBM traffic); built directly in bf16 so the kernel reads half
        # the bytes and does no per-tile cast.
        x16 = x.astype(jnp.bfloat16)
        xc = jnp.concatenate(
            [jnp.roll(x16, 1, axis=1), x16, jnp.roll(x16, -1, axis=1)], axis=-1)  # (B, L, 3C)
        if pad:
            # TODO(synk): rare path (L not a multiple of 8); costs one extra
            # output copy for out[:, :L] — mask the last tile's store instead
            # if this ever becomes hot.
            xc = jnp.pad(xc, ((0, 0), (0, Lp - L), (0, 0)))

        in_specs = [pl.BlockSpec((None, tl, 3 * C), lambda l, b: (b, l, 0))]
        args = [xc]
        if has_mark:
            # Pre-add field offsets (tiny int add on (B, L, 4)) so the kernel's
            # multi-hot build is just 4 compares + 3 ors + a cast.
            xm = x_mark[..., :4].astype(jnp.int32) + self.offsets
            if pad:
                xm = jnp.pad(xm, ((0, 0), (0, Lp - L), (0, 0)))
            in_specs.append(pl.BlockSpec((None, tl, 4), lambda l, b: (b, l, 0)))
            args.append(xm)
            in_specs.append(pl.BlockSpec(self.wtab.shape, lambda l, b: (0, 0)))
            args.append(self.wtab)
            kernel = functools.partial(_kernel_with_mark, n_fields=4)
            k_eff = self.wtab.shape[0]
        else:
            in_specs.append(pl.BlockSpec(self.w_fused.shape, lambda l, b: (0, 0)))
            args.append(self.w_fused)
            kernel = _kernel_no_mark
            k_eff = 3 * C

        # PE block depends only on l; batch is the innermost grid dim so this
        # block is not re-fetched across the batch loop.
        pe_slice = self.pe[:Lp]                                               # (Lp, D) f32
        in_specs.append(pl.BlockSpec((tl, D), lambda l, b: (l, 0)))
        args.append(pe_slice)

        out_bytes = B * Lp * D * jnp.dtype(self.out_dtype).itemsize
        bytes_accessed = int(xc.size * 2
                             + (B * Lp * 4 * 4 if has_mark else 0)
                             + pe_slice.size * 4
                             + (self.wtab.size * 2 if has_mark else self.w_fused.size * 2)
                             + out_bytes)
        cost = pl.CostEstimate(flops=2 * B * Lp * k_eff * D,
                               transcendentals=0,
                               bytes_accessed=bytes_accessed)

        # TODO(synk): for d_model < 128 the output stores are lane-sparse
        # (masked vst); typical Informer d_model=512 is already lane-dense.
        out = pl.pallas_call(
            kernel,
            out_shape=jax.ShapeDtypeStruct((B, Lp, D), self.out_dtype),
            grid=(Lp // tl, B),
            in_specs=in_specs,
            out_specs=pl.BlockSpec((None, tl, D), lambda l, b: (b, l, 0)),
            compiler_params=pltpu.CompilerParams(
                dimension_semantics=("parallel", "parallel")),
            cost_estimate=cost,
        )(*args)
        return out[:, :L] if pad else out


# ---------------------------------------------------------------------------
# Pure-JAX f32 reference for correctness checking.
# ---------------------------------------------------------------------------
def _reference(model, x, x_mark):
    x_prev = jnp.roll(x, 1, axis=1)
    x_next = jnp.roll(x, -1, axis=1)
    conv = (jnp.einsum("blc,cd->bld", x_prev, model.conv_w_taps[0])
            + jnp.einsum("blc,cd->bld", x, model.conv_w_taps[1])
            + jnp.einsum("blc,cd->bld", x_next, model.conv_w_taps[2]))
    res = conv + model.pe[: x.shape[1]][None]
    if x_mark is not None:
        xm = x_mark.astype(jnp.int32)
        res = res + (model.hour_tbl[xm[..., 3]]
                     + model.weekday_tbl[xm[..., 2]]
                     + model.day_tbl[xm[..., 1]]
                     + model.month_tbl[xm[..., 0]])
    return res


if __name__ == "__main__":
    B, L, C_IN, D_MODEL = 2, 8, 4, 32

    key = jax.random.PRNGKey(0)
    k_w, k_x, k_m = jax.random.split(key, 3)

    model = DataEmbeddingPallas(c_in=C_IN, d_model=D_MODEL, key=k_w)

    x = jax.random.normal(k_x, (B, L, C_IN), dtype=jnp.float32)
    # x_mark columns: [month(0..12), day(0..31), weekday(0..6), hour(0..23)]
    months = jax.random.randint(k_m, (B, L, 1), 0, 13)
    days = jax.random.randint(jax.random.fold_in(k_m, 1), (B, L, 1), 0, 32)
    weekdays = jax.random.randint(jax.random.fold_in(k_m, 2), (B, L, 1), 0, 7)
    hours = jax.random.randint(jax.random.fold_in(k_m, 3), (B, L, 1), 0, 24)
    x_mark = jnp.concatenate([months, days, weekdays, hours], axis=-1).astype(jnp.int32)

    # Path with temporal marks.
    out = jax.block_until_ready(model(x, x_mark))
    assert out.shape == (B, L, D_MODEL)
    ref = _reference(model, x, x_mark)
    assert jnp.allclose(out.astype(jnp.float32), ref, atol=1e-1, rtol=5e-2), (
        "max abs err = %f" % float(jnp.max(jnp.abs(out.astype(jnp.float32) - ref))))

    # x_mark=None path (value + positional embedding only).
    out2 = jax.block_until_ready(model(x, None))
    ref2 = _reference(model, x, None)
    assert jnp.allclose(out2.astype(jnp.float32), ref2, atol=1e-1, rtol=5e-2)

    print("KERNEL_OK")
</pallas_src>

<mosaic_0001>
module attributes {stable_mosaic.version = 11 : i64} {
  func.func @_kernel_with_mark(%arg0: i32, %arg1: i32, %arg2: memref<1x8x12xbf16, #tpu.memory_space<vmem>>, %arg3: memref<1x8x4xi32, #tpu.memory_space<vmem>>, %arg4: memref<140x32xbf16, #tpu.memory_space<vmem>>, %arg5: memref<8x32xf32, #tpu.memory_space<vmem>>, %arg6: memref<1x8x32xbf16, #tpu.memory_space<vmem>>) attributes {dimension_semantics = [#tpu.dimension_semantics<parallel>, #tpu.dimension_semantics<parallel>], iteration_bounds = array<i64: 1, 2>, scalar_prefetch = 0 : i64, scratch_operands = 0 : i64, tpu.core_type = #tpu.core_type<tc>, window_params = [{transform_indices = @transform_0, window_bounds = array<i64: 1, 8, 12>}, {transform_indices = @transform_1, window_bounds = array<i64: 1, 8, 4>}, {pipeline_mode = #tpu.pipeline_mode<synchronous>, transform_indices = @transform_2, window_bounds = array<i64: 140, 32>}, {transform_indices = @transform_3, window_bounds = array<i64: 8, 32>}, {transform_indices = @transform_4, window_bounds = array<i64: 1, 8, 32>}]} {
    %c0 = arith.constant 0 : index
    %c0_0 = arith.constant 0 : index
    %c0_1 = arith.constant 0 : index
    %0 = vector.load %arg3[%c0, %c0_0, %c0_1] : memref<1x8x4xi32, #tpu.memory_space<vmem>>, vector<1x8x4xi32>
    %1 = vector.shape_cast %0 : vector<1x8x4xi32> to vector<8x4xi32>
    %2 = tpu.iota {dimensions = array<i32: 1>} : vector<8x128xi32>
    %3 = vector.extract_strided_slice %1 {offsets = [0, 0], sizes = [8, 1], strides = [1, 1]} : vector<8x4xi32> to vector<8x1xi32>
    %4 = vector.broadcast %3 : vector<8x1xi32> to vector<8x128xi32>
    %5 = arith.cmpi eq, %2, %4 : vector<8x128xi32>
    %6 = vector.extract_strided_slice %1 {offsets = [0, 1], sizes = [8, 1], strides = [1, 1]} : vector<8x4xi32> to vector<8x1xi32>
    %7 = vector.broadcast %6 : vector<8x1xi32> to vector<8x128xi32>
    %8 = arith.cmpi eq, %2, %7 : vector<8x128xi32>
    %9 = arith.ori %5, %8 : vector<8x128xi1>
    %10 = vector.extract_strided_slice %1 {offsets = [0, 2], sizes = [8, 1], strides = [1, 1]} : vector<8x4xi32> to vector<8x1xi32>
    %11 = vector.broadcast %10 : vector<8x1xi32> to vector<8x128xi32>
    %12 = arith.cmpi eq, %2, %11 : vector<8x128xi32>
    %13 = arith.ori %9, %12 : vector<8x128xi1>
    %14 = vector.extract_strided_slice %1 {offsets = [0, 3], sizes = [8, 1], strides = [1, 1]} : vector<8x4xi32> to vector<8x1xi32>
    %15 = vector.broadcast %14 : vector<8x1xi32> to vector<8x128xi32>
    %16 = arith.cmpi eq, %2, %15 : vector<8x128xi32>
    %17 = arith.ori %13, %16 : vector<8x128xi1>
    %18 = arith.extui %17 : vector<8x128xi1> to vector<8x128xi32>
    %19 = arith.sitofp %18 : vector<8x128xi32> to vector<8x128xf32>
    %20 = arith.truncf %19 : vector<8x128xf32> to vector<8x128xbf16>
    %c0_2 = arith.constant 0 : index
    %c0_3 = arith.constant 0 : index
    %c0_4 = arith.constant 0 : index
    %21 = vector.load %arg2[%c0_2, %c0_3, %c0_4] : memref<1x8x12xbf16, #tpu.memory_space<vmem>>, vector<1x8x12xbf16>
    %22 = vector.shape_cast %21 : vector<1x8x12xbf16> to vector<8x12xbf16>
    %23 = tpu.concatenate %20, %22 in 1 : vector<8x128xbf16>, vector<8x12xbf16> -> vector<8x140xbf16>
    %c0_5 = arith.constant 0 : index
    %c0_6 = arith.constant 0 : index
    %24 = vector.load %arg4[%c0_5, %c0_6] : memref<140x32xbf16, #tpu.memory_space<vmem>>, vector<140x32xbf16>
    %cst = arith.constant dense<0.000000e+00> : vector<8x32xf32>
    %25 = tpu.matmul %23, %24, %cst {dimension_numbers = #tpu.dot_dimension_numbers<[1], [0], [0], [1], [0, 0, 1, 1], [], []>} : vector<8x140xbf16>, vector<140x32xbf16>, vector<8x32xf32> -> vector<8x32xf32>
    %c0_7 = arith.constant 0 : index
    %c0_8 = arith.constant 0 : index
    %26 = vector.load %arg5[%c0_7, %c0_8] : memref<8x32xf32, #tpu.memory_space<vmem>>, vector<8x32xf32>
    %27 = arith.addf %25, %26 : vector<8x32xf32>
    %28 = arith.truncf %27 : vector<8x32xf32> to vector<8x32xbf16>
    %c0_9 = arith.constant 0 : index
    %c0_10 = arith.constant 0 : index
    %c0_11 = arith.constant 0 : index
    %29 = vector.load %arg6[%c0_9, %c0_10, %c0_11] : memref<1x8x32xbf16, #tpu.memory_space<vmem>>, vector<1x8x32xbf16>
    %30 = vector.shape_cast %29 : vector<1x8x32xbf16> to vector<8x32xbf16>
    %31 = vector.shape_cast %28 : vector<8x32xbf16> to vector<1x8x32xbf16>
    tpu.vector_store %arg6[%c0_9, %c0_10, %c0_11], %31 {strides = array<i32>} : memref<1x8x32xbf16, #tpu.memory_space<vmem>>, vector<1x8x32xbf16>,
    return
  }
  func.func @transform_0(%arg0: i32, %arg1: i32) -> (i32, i32, i32) {
    %c0_i32 = arith.constant 0 : i32
    %c0_i32_0 = arith.constant 0 : i32
    return %arg1, %arg0, %c0_i32 : i32, i32, i32
  }
  func.func @transform_1(%arg0: i32, %arg1: i32) -> (i32, i32, i32) {
    %c0_i32 = arith.constant 0 : i32
    %c0_i32_0 = arith.constant 0 : i32
    return %arg1, %arg0, %c0_i32 : i32, i32, i32
  }
  func.func @transform_2(%arg0: i32, %arg1: i32) -> (i32, i32) {
    %c0_i32 = arith.constant 0 : i32
    %c0_i32_0 = arith.constant 0 : i32
    %c0_i32_1 = arith.constant 0 : i32
    return %c0_i32, %c0_i32_0 : i32, i32
  }
  func.func @transform_3(%arg0: i32, %arg1: i32) -> (i32, i32) {
    %c0_i32 = arith.constant 0 : i32
    %c0_i32_0 = arith.constant 0 : i32
    return %arg0, %c0_i32 : i32, i32
  }
  func.func @transform_4(%arg0: i32, %arg1: i32) -> (i32, i32, i32) {
    %c0_i32 = arith.constant 0 : i32
    %c0_i32_0 = arith.constant 0 : i32
    return %arg1, %arg0, %c0_i32 : i32, i32, i32
  }
}

</mosaic_0001>

<llo_original>
// kernel: tpu_custom_call.1
$region0: #{tpu_custom_call.1}
  #allocation0 [shape = 'u32[]', space=smem, size = 0x4, offset = 0x4, fixed_abs, tag = 'smem constant byte address 0x4 - core index']
  #allocation1 [shape = 'u32[72,128]{1,0:T(1,128)}', space=vmem, size = 0x9000, scoped, tag = 'internal scratch']
  %s0 = inlined_call_operand.vmem [shape: bf16[2,8,12], index: 0, kind: input, shape index: {}]
  %s1 = inlined_call_operand.vmem [shape: s32[2,8,4], index: 1, kind: input, shape index: {}]
  %s2 = inlined_call_operand.vmem [shape: bf16[140,32], index: 2, kind: input, shape index: {}]
  %s3 = inlined_call_operand.vmem [shape: f32[8,32], index: 3, kind: input, shape index: {}]
  %s4 = inlined_call_operand.hbm [shape: bf16[2,8,32], index: 4, kind: output, shape index: {}]
  %s5 = sld [smem:[#allocation0]]
  $region49: #{tpu_custom_call.1} parent=0
    _
  %s7 = ssub.s32 1, %s5
  %s8 = scalar_select 0, %s7, %s5
  $region1: #{tpu_custom_call.1} parent=0
    #allocation2 [shape = 'u8[4096]{0}', space=vmem, size = 0x1000, scoped, tag = 'output window, operand 0']
    #allocation3 [shape = 's32[2]{0}', space=sflag, size = 0x8, scoped, tag = 'scoped memory for tpu_custom_call.1']
    %9 = vsyncpa [#allocation3], 0
    %s10 = scalar_lea.sflag [#allocation3], 1
    %11 = vsyncpa %s10, 0
    loop: start=0, step=1, limit=4
    $region2: #{tpu_custom_call.1} parent=1 // loop_pre_header
      _
    $region3: #{tpu_custom_call.1} parent=1 // loop_header
      %s13 = sphi 0, %s17
      %p14 = scmp.ge.s32.totalorder %s13, 4
      %s20 = sphi 0, %s32
      %s21 = sphi 0, %s28
      %s22 = sphi 0, %s20
      %s23 = sphi 0, %s21
      %s24 = sphi 0, %s22
      %s25 = sphi 0, %s23
      %s37 = sphi 0, %s39
      %s40 = sphi 0, %s37
      %s41 = sphi 0, %s40
      %s57 = sphi 0, %s41
      %s65 = sphi 0, %s67
      %s68 = sphi 0, %s65
      %s69 = sphi 0, %s68
      %s85 = sphi 0, %s69
      %s89 = sphi 0, %s89
      %s91 = sphi 0, %s89
      %s92 = sphi 0, %s91
      %s106 = sphi 0, %s92
      %s112 = sphi 0, %s114
      %s115 = sphi 0, %s112
      %s116 = sphi 0, %s115
      %s132 = sphi 0, %s116
      %s140 = sphi 0, %s142
      %s143 = sphi 0, %s140
      %s144 = sphi 0, %s143
      %s160 = sphi 0, %s144
    $region4: #{tpu_custom_call.1} parent=1 // loop_header_branch
      %16 = sbr.rel (%p14) target = $region8
    $region5: #{tpu_custom_call.1} parent=1 // loop_body
      %s18 = ssub.s32 %s13, 1
      %s19 = ssub.s32 %s13, 2
      %s26 = sadd.s32 1, %s21
      %p27 = scmp.ge.s32.totalorder %s26, 2
      %s28 = scalar_select %p27, 0, %s26
      %s29 = sadd.s32 1, %s20
      %s30 = scalar_select %p27, %s29, %s20
      %p31 = scmp.ge.s32.totalorder %s30, 1
      %s32 = scalar_select %p31, 0, %s30
      %s33 = ssub.s32 %s21, %s28
      %s34 = ssub.s32 %s20, %s32
      %s35 = sor.u32 %s33, %s34
      %p36 = scmp.eq.s32.totalorder %s35, 0
      %s38 = sadd.s32 %s37, 1
      %s39 = scalar_select %p36, %s37, %s38
      %p42 = pneg %p36
      %p43 = scmp.eq.s32.totalorder %s13, 1
      %p44 = por %p42, %p43
      %p45 = scmp.ne.s32.totalorder %s37, %s40
      %p46 = scmp.eq.s32.totalorder %s13, 0
      %p47 = por %p45, %p46
      %p48 = scmp.ne.s32.totalorder %s37, %s40
      %p49 = scmp.eq.s32.totalorder %s18, 1
      %p50 = por %p48, %p49
      %p51 = scmp.ne.s32.totalorder %s40, %s41
      %p52 = scmp.eq.s32.totalorder %s18, 0
      %p53 = por %p51, %p52
      %p54 = scmp.ne.s32.totalorder %s40, %s41
      %p55 = scmp.eq.s32.totalorder %s19, 1
      %p56 = por %p54, %p55
      %p58 = scmp.ne.s32.totalorder %s41, %s57
      %p59 = scmp.eq.s32.totalorder %s19, 0
      %p60 = por %p58, %p59
      %s61 = ssub.s32 %s21, %s28
      %s62 = ssub.s32 %s20, %s32
      %s63 = sor.u32 %s61, %s62
      %p64 = scmp.eq.s32.totalorder %s63, 0
      %s66 = sadd.s32 %s65, 1
      %s67 = scalar_select %p64, %s65, %s66
      %p70 = pneg %p64
      %p71 = scmp.eq.s32.totalorder %s13, 1
      %p72 = por %p70, %p71
      %p73 = scmp.ne.s32.totalorder %s65, %s68
      %p74 = scmp.eq.s32.totalorder %s13, 0
      %p75 = por %p73, %p74
      %p76 = scmp.ne.s32.totalorder %s65, %s68
      %p77 = scmp.eq.s32.totalorder %s18, 1
      %p78 = por %p76, %p77
      %p79 = scmp.ne.s32.totalorder %s68, %s69
      %p80 = scmp.eq.s32.totalorder %s18, 0
      %p81 = por %p79, %p80
      %p82 = scmp.ne.s32.totalorder %s68, %s69
      %p83 = scmp.eq.s32.totalorder %s19, 1
      %p84 = por %p82, %p83
      %p86 = scmp.ne.s32.totalorder %s69, %s85
      %p87 = scmp.eq.s32.totalorder %s19, 0
      %p88 = por %p86, %p87
      %s90 = sadd.s32 %s89, 1
      %p93 = scmp.eq.s32.totalorder %s13, 1
      %p94 = scmp.ne.s32.totalorder %s89, %s91
      %p95 = scmp.eq.s32.totalorder %s13, 0
      %p96 = por %p94, %p95
      %p97 = scmp.ne.s32.totalorder %s89, %s91
      %p98 = scmp.eq.s32.totalorder %s18, 1
      %p99 = por %p97, %p98
      %p100 = scmp.ne.s32.totalorder %s91, %s92
      %p101 = scmp.eq.s32.totalorder %s18, 0
      %p102 = por %p100, %p101
      %p103 = scmp.ne.s32.totalorder %s91, %s92
      %p104 = scmp.eq.s32.totalorder %s19, 1
      %p105 = por %p103, %p104
      %p107 = scmp.ne.s32.totalorder %s92, %s106
      %p108 = scmp.eq.s32.totalorder %s19, 0
      %p109 = por %p107, %p108
      %s110 = ssub.s32 %s20, %s32
      %p111 = scmp.eq.s32.totalorder %s110, 0
      %s113 = sadd.s32 %s112, 1
      %s114 = scalar_select %p111, %s112, %s113
      %p117 = pneg %p111
      %p118 = scmp.eq.s32.totalorder %s13, 1
      %p119 = por %p117, %p118
      %p120 = scmp.ne.s32.totalorder %s112, %s115
      %p121 = scmp.eq.s32.totalorder %s13, 0
      %p122 = por %p120, %p121
      %p123 = scmp.ne.s32.totalorder %s112, %s115
      %p124 = scmp.eq.s32.totalorder %s18, 1
      %p125 = por %p123, %p124
      %p126 = scmp.ne.s32.totalorder %s115, %s116
      %p127 = scmp.eq.s32.totalorder %s18, 0
      %p128 = por %p126, %p127
      %p129 = scmp.ne.s32.totalorder %s115, %s116
      %p130 = scmp.eq.s32.totalorder %s19, 1
      %p131 = por %p129, %p130
      %p133 = scmp.ne.s32.totalorder %s116, %s132
      %p134 = scmp.eq.s32.totalorder %s19, 0
      %p135 = por %p133, %p134
      %s136 = ssub.s32 %s21, %s28
      %s137 = ssub.s32 %s20, %s32
      %s138 = sor.u32 %s136, %s137
      %p139 = scmp.eq.s32.totalorder %s138, 0
      %s141 = sadd.s32 %s140, 1
      %s142 = scalar_select %p139, %s140, %s141
      %p145 = pneg %p139
      %p146 = scmp.eq.s32.totalorder %s13, 1
      %p147 = por %p145, %p146
      %p148 = scmp.ne.s32.totalorder %s140, %s143
      %p149 = scmp.eq.s32.totalorder %s13, 0
      %p150 = por %p148, %p149
      %p151 = scmp.ne.s32.totalorder %s140, %s143
      %p152 = scmp.eq.s32.totalorder %s18, 1
      %p153 = por %p151, %p152
      %p154 = scmp.ne.s32.totalorder %s143, %s144
      %p155 = scmp.eq.s32.totalorder %s18, 0
      %p156 = por %p154, %p155
      %p157 = scmp.ne.s32.totalorder %s143, %s144
      %p158 = scmp.eq.s32.totalorder %s19, 1
      %p159 = por %p157, %p158
      %p161 = scmp.ne.s32.totalorder %s144, %s160
      %p162 = scmp.eq.s32.totalorder %s19, 0
      %p163 = por %p161, %p162
      %p164 = scmp.le.s32.totalorder 1, %s13
      %p165 = scmp.lt.s32.totalorder %s13, 3
      %p166 = pnand %p164, %p165
      %p167 = pneg %p166
      // Predicated region
      $region9: #{tpu_custom_call.1} parent=5 // pred_check
        _
      $region10: #{tpu_custom_call.1} parent=5 // pred_check_branch
        %169 = sbr.rel (%p166) target = $region12
      $region11: #{tpu_custom_call.1} parent=5 // pred_region
        %s170 = ssub.s32 %s13, 1
        // Predicated region
        $region13: #{tpu_custom_call.1} parent=11 // pred_check
          %p171 = pneg %p102
        $region14: #{tpu_custom_call.1} parent=11 // pred_check_branch
          %173 = sbr.rel (%p171) target = $region16
        $region15: #{tpu_custom_call.1} parent=11 // pred_region
          _
        $region16: #{tpu_custom_call.1} parent=11 // pred_fallthru
          _
        // Predicated region
        $region17: #{tpu_custom_call.1} parent=11 // pred_check
          %p174 = pneg %p128
        $region18: #{tpu_custom_call.1} parent=11 // pred_check_branch
          %176 = sbr.rel (%p174) target = $region20
        $region19: #{tpu_custom_call.1} parent=11 // pred_region
          %p177 = scmp.lt.s32.totalorder %s22, 0
          %s178 = scalar_select %p177, %s22, 0
          %s179 = smul.addr %s178, 8
          %s180 = scalar_lea.vmem %s3, %s179
        $region20: #{tpu_custom_call.1} parent=11 // pred_fallthru
          _
      $region12: #{tpu_custom_call.1} parent=5 // pred_fallthru
        _
      %p181 = scmp.lt.s32.totalorder %s13, 2
      // Predicated region
      $region21: #{tpu_custom_call.1} parent=5 // pred_check
        %p182 = pneg %p181
      $region22: #{tpu_custom_call.1} parent=5 // pred_check_branch
        %184 = sbr.rel (%p182) target = $region24
      $region23: #{tpu_custom_call.1} parent=5 // pred_region
        // Predicated region
        $region25: #{tpu_custom_call.1} parent=23 // pred_check
          %p185 = pneg %p47
        $region26: #{tpu_custom_call.1} parent=23 // pred_check_branch
          %187 = sbr.rel (%p185) target = $region28
        $region27: #{tpu_custom_call.1} parent=23 // pred_region
          %p188 = scmp.lt.s32.totalorder %s21, 1
          %s189 = scalar_select %p188, %s21, 1
          %p190 = scmp.lt.s32.totalorder %s20, 0
          %s191 = scalar_select %p190, %s20, 0
          %s192 = sadd.s32 %s191, %s189
          %s193 = smul.addr %s192, 4
          %s194 = scalar_lea.vmem %s0, %s193
        $region28: #{tpu_custom_call.1} parent=23 // pred_fallthru
          _
        // Predicated region
        $region29: #{tpu_custom_call.1} parent=23 // pred_check
          %p195 = pneg %p75
        $region30: #{tpu_custom_call.1} parent=23 // pred_check_branch
          %197 = sbr.rel (%p195) target = $region32
        $region31: #{tpu_custom_call.1} parent=23 // pred_region
          %p198 = scmp.lt.s32.totalorder %s21, 1
          %s199 = scalar_select %p198, %s21, 1
          %p200 = scmp.lt.s32.totalorder %s20, 0
          %s201 = scalar_select %p200, %s20, 0
          %s202 = sadd.s32 %s201, %s199
          %s203 = smul.addr %s202, 8
          %s204 = scalar_lea.vmem %s1, %s203
        $region32: #{tpu_custom_call.1} parent=23 // pred_fallthru
          _
      $region24: #{tpu_custom_call.1} parent=5 // pred_fallthru
        _
      %p205 = scmp.le.s32.totalorder 1, %s13
      %p206 = scmp.lt.s32.totalorder %s13, 3
      %p207 = pnand %p205, %p206
      %p208 = pneg %p207
      // Predicated region
      $region33: #{tpu_custom_call.1} parent=5 // pred_check
        _
      $region34: #{tpu_custom_call.1} parent=5 // pred_check_branch
        %210 = sbr.rel (%p207) target = $region36
      $region35: #{tpu_custom_call.1} parent=5 // pred_region
        %s211 = ssub.s32 %s13, 1
        %p212 = scmp.lt.s32.totalorder %s23, 1
        %s213 = scalar_select %p212, %s23, 1
        %p214 = scmp.lt.s32.totalorder %s22, 0
        %s215 = scalar_select %p214, %s22, 0
        %s216 = sadd.s32 %s215, %s213
        %s217 = smul.addr %s216, 4
        %s218 = scalar_lea.vmem %s0, %s217
        %p219 = pneg %p53
        %p220 = pneg %p50
        %p221 = scmp.lt.s32.totalorder %s23, 1
        %s222 = scalar_select %p221, %s23, 1
        %p223 = scmp.lt.s32.totalorder %s22, 0
        %s224 = scalar_select %p223, %s22, 0
        %s225 = sadd.s32 %s224, %s222
        %s226 = smul.addr %s225, 8
        %s227 = scalar_lea.vmem %s1, %s226
        %p228 = pneg %p81
        %p229 = pneg %p78
        %p230 = pneg %p102
        %p231 = pneg %p99
        %p232 = scmp.lt.s32.totalorder %s22, 0
        %s233 = scalar_select %p232, %s22, 0
        %s234 = smul.addr %s233, 8
        %s235 = scalar_lea.vmem %s3, %s234
        %p236 = pneg %p128
        %p237 = pneg %p125
        %p238 = pneg %p156
        %p239 = pneg %p153
        %s240 = sand.u32 %s143, 1
        %s241 = scalar_lea.sflag [#allocation3], %s240
        %s242 = sand.u32 %s143, 1
        %s243 = smul.addr %s242, 4
        %s244 = scalar_lea.vmem [#allocation2], %s243
        %p245 = scmp.lt.s32.totalorder %s23, 1
        %s246 = scalar_select %p245, %s23, 1
        %p247 = scmp.lt.s32.totalorder %s22, 0
        %s248 = scalar_select %p247, %s22, 0
        %s249 = sadd.s32 %s248, %s246
        %s250 = smul.addr %s249, 4
        %s251 = scalar_lea.vmem %s0, %s250
        %p252 = scmp.lt.s32.totalorder %s23, 1
        %s253 = scalar_select %p252, %s23, 1
        %p254 = scmp.lt.s32.totalorder %s22, 0
        %s255 = scalar_select %p254, %s22, 0
        %s256 = sadd.s32 %s255, %s253
        %s257 = smul.addr %s256, 8
        %s258 = scalar_lea.vmem %s1, %s257
        %p259 = scmp.lt.s32.totalorder %s22, 0
        %s260 = scalar_select %p259, %s22, 0
        %s261 = smul.addr %s260, 8
        %s262 = scalar_lea.vmem %s3, %s261
        %v264 = vld [vmem:[%s258] sm:$0xff]
        %v265 = vlaneseq
        %v266 = vand.u32 %v265, 127
        %267 = vset.pattern.permute.xlu0 0
        %268 = vperm.xlu0 %267, %v264
        %v269 = vpop.permute.xlu0 %268
        %vm270 = vcmp.eq.s32.totalorder %v266, %v269
        %271 = vset.pattern.permute.xlu0 1
        %272 = vperm.xlu0 %271, %v264
        %v273 = vpop.permute.xlu0 %272
        %vm274 = vcmp.eq.s32.totalorder %v266, %v273
        %vm275 = vmor %vm270, %vm274
        %276 = vset.pattern.permute.xlu0 2
        %277 = vperm.xlu0 %276, %v264
        %v278 = vpop.permute.xlu0 %277
        %vm279 = vcmp.eq.s32.totalorder %v266, %v278
        %vm280 = vmor %vm275, %vm279
        %281 = vset.pattern.permute.xlu0 3
        %282 = vperm.xlu0 %281, %v264
        %v283 = vpop.permute.xlu0 %282
        %vm284 = vcmp.eq.s32.totalorder %v266, %v283
        %vm285 = vmor %vm280, %vm284
        %v286 = vsel %vm285, 1, 0
        %v287 = vcvt.s32.f32 %v286
        %v288 = vpack.c.bf16 %v287, %v287
        %v289 = vld [vmem:[%s251] sm:$0xf]
        %v290 = vld [vmem:[%s2] sm:$0xf]
        %v291 = vld [vmem:[%s2 + $0x4] sm:$0xf]
        %v292 = vld [vmem:[%s2 + $0x8] sm:$0xf]
        %v293 = vld [vmem:[%s2 + $0xc] sm:$0xf]
        %v294 = vld [vmem:[%s2 + $0x10] sm:$0xf]
        %v295 = vld [vmem:[%s2 + $0x14] sm:$0xf]
        %v296 = vld [vmem:[%s2 + $0x18] sm:$0xf]
        %v297 = vld [vmem:[%s2 + $0x1c] sm:$0xf]
        %v298 = vld [vmem:[%s2 + $0x20] sm:$0xf]
        %v299 = vld [vmem:[%s2 + $0x24] sm:$0xf]
        %v300 = vld [vmem:[%s2 + $0x28] sm:$0xf]
        %v301 = vld [vmem:[%s2 + $0x2c] sm:$0xf]
        %v302 = vld [vmem:[%s2 + $0x30] sm:$0xf]
        %v303 = vld [vmem:[%s2 + $0x34] sm:$0xf]
        %v304 = vld [vmem:[%s2 + $0x38] sm:$0xf]
        %v305 = vld [vmem:[%s2 + $0x3c] sm:$0xf]
        %v306 = vld [vmem:[%s2 + $0x40] sm:$0xf]
        %v307 = vld [vmem:[%s2 + $0x44] sm:$0x3]
        %v308 = vld [vmem:[%s262] sm:$0xff]
        %v327 = vunpack.c.l.b16 %v290
        %v328 = vunpack.c.l.b16 %v291
        %v329 = vunpack.c.l.b16 %v292
        %v330 = vunpack.c.l.b16 %v293
        %v331 = vunpack.c.l.b16 %v294
        %v332 = vunpack.c.l.b16 %v295
        %v333 = vunpack.c.l.b16 %v296
        %v334 = vunpack.c.l.b16 %v297
        %v335 = vunpack.c.l.b16 %v298
        %v336 = vunpack.c.l.b16 %v299
        %v337 = vunpack.c.l.b16 %v300
        %v338 = vunpack.c.l.b16 %v301
        %v339 = vunpack.c.l.b16 %v302
        %v340 = vunpack.c.l.b16 %v303
        %v341 = vunpack.c.l.b16 %v304
        %v342 = vunpack.c.l.b16 %v305
        %v343 = vunpack.c.l.b16 %v306
        %v344 = vunpack.c.l.b16 %v307
        %v345 = vpack.c.b16 %v328, %v327
        %v346 = vpack.c.b16 %v330, %v329
        %v347 = vpack.c.b16 %v332, %v331
        %v348 = vpack.c.b16 %v334, %v333
        %v349 = vpack.c.b16 %v336, %v335
        %v350 = vpack.c.b16 %v338, %v337
        %v351 = vpack.c.b16 %v340, %v339
        %v352 = vpack.c.b16 %v342, %v341
        %v353 = vpack.c.b16 %v344, %v343
        %vm362 = vcmask 97280
        %v364 = vsel %vm362, %v289, 0
        %vm366 = vcmask 1045504
        %v368 = vsel %vm366, %v353, 0
        %370 = vmatpush.bf16.msra.mxu0 %v352
        %371 = vmatpush.bf16.msra.mxu0 %v351
        %372 = vmatpush.bf16.msra.mxu0 %v350
        %373 = vmatpush.bf16.msra.mxu0 %v349
        %374 = vmatpush.bf16.msra.mxu0 %v348
        %375 = vmatpush.bf16.msra.mxu0 %v347
        %376 = vmatpush.bf16.msra.mxu0 %v346
        %377 = vmatpush.bf16.msra.mxu0 %v345
        %378 = vmatmul.bf16.gmra.mxu0 %v288
        %v379 = vpop.f32.mrf.mxu0
        %v380 = vadd.f32 %v308, %v379
        %v381 = vpop.f32.mrf.mxu0
        %382 = vdwg.mxu0
        %383 = vmatpush.bf16.msra.mxu0 0
        %384 = vmatpush.bf16.msra.mxu0 0
        %385 = vmatpush.bf16.msra.mxu0 0
        %386 = vmatpush.bf16.msra.mxu0 0
        %387 = vmatpush.bf16.msra.mxu0 0
        %388 = vmatpush.bf16.msra.mxu0 0
        %389 = vmatpush.bf16.msra.mxu0 0
        %390 = vmatpush.bf16.msra.mxu0 %v368
        %391 = vmatmul.bf16.gmra.mxu0 %v364
        %v392 = vpop.f32.mrf.mxu0
        %v393 = vadd.f32 %v380, %v392
        %v394 = vpop.f32.mrf.mxu0
        %395 = vdwg.mxu0
        %v396 = vpack.c.bf16 %v393, %v393
        %vm397 = vcmask 257024
        %398 = vst.msk [vmem:[%s244] sm:$0xf] %vm397, %v396
        %s399 = sand.u32 %s143, 1
        %s400 = scalar_lea.sflag [#allocation3], %s399
        %s401 = sand.u32 %s143, 1
        %s402 = smul.addr %s401, 4
        %s403 = scalar_lea.vmem [#allocation2], %s402
        // Predicated region
        $region37: #{tpu_custom_call.1} parent=35 // pred_check
          %p404 = pneg %p153
        $region38: #{tpu_custom_call.1} parent=35 // pred_check_branch
          %406 = sbr.rel (%p404) target = $region40
        $region39: #{tpu_custom_call.1} parent=35 // pred_region
          %408 = vsyncadd %s400, 0
          %s409 = sadd.s32 %s22, %s23
          %s410 = smul.addr %s409, 4
          %s411 = scalar_lea.hbm %s4, %s410
          %s413 = sshll.u32 %s403, 4
          %s414 = int_to_ptr.vmem [resolvable:$true] %s413
          %s415 = sshll.u32 %s411, 4
          %s416 = int_to_ptr.hbm [resolvable:$true] %s415
          %418 = dma.vmem_to_hbm [thread:$0]  %s414, 64, %s416, %s400
        $region40: #{tpu_custom_call.1} parent=35 // pred_fallthru
          _
      $region36: #{tpu_custom_call.1} parent=5 // pred_fallthru
        _
      %p419 = scmp.le.s32.totalorder 2, %s13
      // Predicated region
      $region41: #{tpu_custom_call.1} parent=5 // pred_check
        %p420 = pneg %p419
      $region42: #{tpu_custom_call.1} parent=5 // pred_check_branch
        %422 = sbr.rel (%p420) target = $region44
      $region43: #{tpu_custom_call.1} parent=5 // pred_region
        %s423 = ssub.s32 %s13, 2
        // Predicated region
        $region45: #{tpu_custom_call.1} parent=43 // pred_check
          %p424 = pneg %p159
        $region46: #{tpu_custom_call.1} parent=43 // pred_check_branch
          %426 = sbr.rel (%p424) target = $region48
        $region47: #{tpu_custom_call.1} parent=43 // pred_region
          %s427 = sand.u32 %s144, 1
          %s428 = scalar_lea.sflag [#allocation3], %s427
          %s429 = sand.u32 %s144, 1
          %s430 = smul.addr %s429, 4
          %s431 = scalar_lea.vmem [#allocation2], %s430
          %433 = dma.done %s428, 64
        $region48: #{tpu_custom_call.1} parent=43 // pred_fallthru
          _
      $region44: #{tpu_custom_call.1} parent=5 // pred_fallthru
        _
    $region6: #{tpu_custom_call.1} parent=1 // loop_footer
      %s17 = sadd.s32 1, %s13
    $region7: #{tpu_custom_call.1} parent=1 // loop_footer_branch
      %12 = sbr.rel target = $region3
    $region8: #{tpu_custom_call.1} parent=1 // loop_exit
      _
    %434 = vsyncpa [#allocation3], 1
    %s435 = scalar_lea.sflag [#allocation3], 1
    %436 = vsyncpa %s435, 1

</llo_original>
